<compile_context>
chip_gen: v6e
topology: v6e:2x2x1
jax: 0.10.0
libtpu: 0.0.40
codegen_flags: <defaults>
</compile_context>

<pallas_src>
import functools

import jax
import jax.numpy as jnp
from jax.experimental import pallas as pl
from jax.experimental.pallas import tpu as pltpu


def _channel_shuffle_kernel(B, groups, x_ref, o_ref, buf, in_sems, out_sems):
    """Single-invocation (grid=()) software-pipelined channel shuffle.

    x_ref:    (B, groups, cpg, H*W)  in HBM (memory_space=ANY)
    o_ref:    (B, cpg, groups, H*W)  in HBM (memory_space=ANY)
    buf:      (2, cpg, groups, H*W)  VMEM double-buffer (output channel order)
    in_sems:  (2, groups) DMA semaphores for the HBM->VMEM reads
    out_sems: (2,)        DMA semaphores for the VMEM->HBM writes
    """

    def read_copies(b, slot):
        # Source x[b, g] is a fully contiguous (cpg, H*W) slab in HBM; the
        # destination view buf[slot, :, g, :] scatters it into shuffled
        # channel order inside VMEM (strides handled by the DMA engine, not
        # by vector loads/stores).
        return [
            pltpu.make_async_copy(
                x_ref.at[b, g], buf.at[slot, :, g, :], in_sems.at[slot, g]
            )
            for g in range(groups)
        ]

    def write_copy(b, slot):
        # Full (cpg, groups, H*W) == (C, H*W) output slab: contiguous HBM write.
        return pltpu.make_async_copy(buf.at[slot], o_ref.at[b], out_sems.at[slot])

    # Prologue: start reads for batch 0 into slot 0.
    for c in read_copies(0, 0):
        c.start()

    # Steady state: rolling double-buffer, no barrier between batch elements.
    for b in range(B):
        slot = b % 2
        nslot = (b + 1) % 2
        if b + 1 < B:
            # Before reusing the other slot for batch b+1's reads, make sure
            # its previous output write (batch b-1) has drained.
            if b >= 1:
                write_copy(b - 1, nslot).wait()
            for c in read_copies(b + 1, nslot):
                c.start()
        # This batch's reads must have landed before we write it out; the
        # write itself stays in flight (drained one/two iterations later).
        for c in read_copies(b, slot):
            c.wait()
        write_copy(b, slot).start()

    # Epilogue: drain the (up to two) outstanding output writes.
    if B >= 2:
        write_copy(B - 2, (B - 2) % 2).wait()
    write_copy(B - 1, (B - 1) % 2).wait()


@functools.partial(jax.jit, static_argnums=(1,))
def channel_shuffle(x, groups: int):
    """Pallas implementation of ShuffleNet ChannelShuffle.forward (NCHW)."""
    B, C, H, W = x.shape
    if C % groups != 0:
        raise ValueError("channels must be divisible by groups")
    cpg = C // groups
    HW = H * W
    itemsize = jnp.dtype(x.dtype).itemsize

    # Free (contiguous) reshape: group-major channel view.
    xr = x.reshape(B, groups, cpg, HW)

    slab_bytes = C * HW * itemsize          # one batch element
    scratch_bytes = 2 * slab_bytes          # double-buffered staging slab
    # TODO(synk): tile the H*W axis if a per-batch slab ever exceeds the v7x
    # VMEM budget (~64 MiB physical / 32 MiB scoped); ShuffleNet activations
    # are orders of magnitude below that.
    vmem_limit = min(max(32 * 1024 * 1024, scratch_bytes + (1 << 20)),
                     128 * 1024 * 1024)

    out = pl.pallas_call(
        functools.partial(_channel_shuffle_kernel, B, groups),
        out_shape=jax.ShapeDtypeStruct((B, cpg, groups, HW), x.dtype),
        in_specs=[pl.BlockSpec(memory_space=pl.ANY)],   # raw HBM ref, manual DMA
        out_specs=pl.BlockSpec(memory_space=pl.ANY),    # raw HBM ref, manual DMA
        scratch_shapes=[
            pltpu.VMEM((2, cpg, groups, HW), x.dtype),  # double-buffered slab
            pltpu.SemaphoreType.DMA((2, groups)),       # read semaphores
            pltpu.SemaphoreType.DMA((2,)),              # write semaphores
        ],
        compiler_params=pltpu.CompilerParams(
            has_side_effects=True,          # output produced only via manual DMA
            vmem_limit_bytes=vmem_limit,
        ),
        cost_estimate=pl.CostEstimate(
            flops=0,
            transcendentals=0,
            bytes_accessed=2 * B * C * HW * itemsize,   # read once + write once
        ),
    )(xr)

    # (B, cpg, groups, H*W) -> (B, C, H, W) is a free contiguous reshape and
    # yields exactly the shuffled channel order ci*groups + g.
    return out.reshape(B, C, H, W)


def channel_shuffle_ref(x, groups: int):
    """Pure-JAX reference matching the PyTorch forward exactly."""
    B, C, H, W = x.shape
    cpg = C // groups
    y = x.reshape(B, groups, cpg, H, W)
    y = jnp.transpose(y, (0, 2, 1, 3, 4))
    return y.reshape(B, C, H, W)


if __name__ == "__main__":
    key = jax.random.PRNGKey(0)

    # Small demo shape consistent with the module (NCHW activations).
    B, C, H, W = 2, 4, 16, 16
    groups = 2
    x = jax.random.normal(key, (B, C, H, W), dtype=jnp.float32)

    out = jax.block_until_ready(channel_shuffle(x, groups))
    ref = channel_shuffle_ref(x, groups)
    assert out.shape == ref.shape and out.dtype == ref.dtype
    assert jnp.array_equal(out, ref), "Pallas channel shuffle mismatch vs reference"

    # ShuffleNet-like small-H*W bf16 maps (the case the perf review targets),
    # plus odd batch / more groups / B=1 to exercise the pipeline prologue,
    # steady state and epilogue.
    for shape, g, dt, seed in [
        ((2, 232, 14, 14), 2, jnp.bfloat16, 1),
        ((3, 232, 14, 14), 4, jnp.bfloat16, 2),
        ((1, 8, 16, 16), 4, jnp.float32, 3),
    ]:
        xi = jax.random.normal(jax.random.PRNGKey(seed), shape, dtype=dt)
        oi = jax.block_until_ready(channel_shuffle(xi, g))
        assert jnp.array_equal(oi, channel_shuffle_ref(xi, g)), (
            f"Pallas channel shuffle mismatch for shape={shape} groups={g}"
        )

    print("KERNEL_OK")
</pallas_src>

<mosaic_0001>
module attributes {stable_mosaic.version = 11 : i64} {
  func.func @_channel_shuffle_kernel(%arg0: memref<2x2x2x256xf32, #tpu.memory_space<any>>, %arg1: memref<2x2x2x256xf32, #tpu.memory_space<any>>, %arg2: memref<2x2x2x256xf32, #tpu.memory_space<vmem>>, %arg3: memref<2x2x!tpu.dma_semaphore, #tpu.memory_space<semaphore_mem>>, %arg4: memref<2x!tpu.dma_semaphore, #tpu.memory_space<semaphore_mem>>) attributes {dimension_semantics = [], scalar_prefetch = 0 : i64, scratch_operands = 3 : i64, tpu.core_type = #tpu.core_type<tc>} {
    %c0_i32 = arith.constant 0 : i32
    %c0_i32_0 = arith.constant 0 : i32
    %c0_i32_1 = arith.constant 0 : i32
    %c0_i32_2 = arith.constant 0 : i32
    %c0_i32_3 = arith.constant 0 : i32
    %c0_i32_4 = arith.constant 0 : i32
    %c0_i32_5 = arith.constant 0 : i32
    %c0_i32_6 = arith.constant 0 : i32
    %0 = tpu.memref_slice %arg0[%c0_i32, %c0_i32_0, %c0_i32_5, %c0_i32_6] : memref<2x2x2x256xf32, #tpu.memory_space<any>> -> memref<1x1x2x256xf32, #tpu.memory_space<any>>
    %1 = tpu.memref_squeeze %0 : memref<1x1x2x256xf32, #tpu.memory_space<any>> -> memref<2x256xf32, #tpu.memory_space<any>>
    %c0_i32_7 = arith.constant 0 : i32
    %c0_i32_8 = arith.constant 0 : i32
    %2 = tpu.memref_slice %arg2[%c0_i32_1, %c0_i32_7, %c0_i32_2, %c0_i32_8] : memref<2x2x2x256xf32, #tpu.memory_space<vmem>> -> memref<1x2x1x256xf32, #tpu.memory_space<vmem>>
    %3 = tpu.memref_squeeze %2 : memref<1x2x1x256xf32, #tpu.memory_space<vmem>> -> memref<2x256xf32, #tpu.memory_space<vmem>>
    %4 = tpu.memref_slice %arg3[%c0_i32_3, %c0_i32_4] : memref<2x2x!tpu.dma_semaphore, #tpu.memory_space<semaphore_mem>> -> memref<1x1x!tpu.dma_semaphore, #tpu.memory_space<semaphore_mem>>
    %5 = tpu.memref_squeeze %4 : memref<1x1x!tpu.dma_semaphore, #tpu.memory_space<semaphore_mem>> -> memref<!tpu.dma_semaphore, #tpu.memory_space<semaphore_mem>>
    tpu.enqueue_dma source(%1 : memref<2x256xf32, #tpu.memory_space<any>>) target(%3 : memref<2x256xf32, #tpu.memory_space<vmem>>) target_semaphore(%5 : memref<!tpu.dma_semaphore, #tpu.memory_space<semaphore_mem>>)
    %c0_i32_9 = arith.constant 0 : i32
    %c1_i32 = arith.constant 1 : i32
    %c0_i32_10 = arith.constant 0 : i32
    %c1_i32_11 = arith.constant 1 : i32
    %c0_i32_12 = arith.constant 0 : i32
    %c1_i32_13 = arith.constant 1 : i32
    %c0_i32_14 = arith.constant 0 : i32
    %c0_i32_15 = arith.constant 0 : i32
    %6 = tpu.memref_slice %arg0[%c0_i32_9, %c1_i32, %c0_i32_14, %c0_i32_15] : memref<2x2x2x256xf32, #tpu.memory_space<any>> -> memref<1x1x2x256xf32, #tpu.memory_space<any>>
    %7 = tpu.memref_squeeze %6 : memref<1x1x2x256xf32, #tpu.memory_space<any>> -> memref<2x256xf32, #tpu.memory_space<any>>
    %c0_i32_16 = arith.constant 0 : i32
    %c0_i32_17 = arith.constant 0 : i32
    %8 = tpu.memref_slice %arg2[%c0_i32_10, %c0_i32_16, %c1_i32_11, %c0_i32_17] : memref<2x2x2x256xf32, #tpu.memory_space<vmem>> -> memref<1x2x1x256xf32, #tpu.memory_space<vmem>>
    %9 = tpu.memref_squeeze %8 : memref<1x2x1x256xf32, #tpu.memory_space<vmem>> -> memref<2x256xf32, #tpu.memory_space<vmem>>
    %10 = tpu.memref_slice %arg3[%c0_i32_12, %c1_i32_13] : memref<2x2x!tpu.dma_semaphore, #tpu.memory_space<semaphore_mem>> -> memref<1x1x!tpu.dma_semaphore, #tpu.memory_space<semaphore_mem>>
    %11 = tpu.memref_squeeze %10 : memref<1x1x!tpu.dma_semaphore, #tpu.memory_space<semaphore_mem>> -> memref<!tpu.dma_semaphore, #tpu.memory_space<semaphore_mem>>
    tpu.enqueue_dma source(%7 : memref<2x256xf32, #tpu.memory_space<any>>) target(%9 : memref<2x256xf32, #tpu.memory_space<vmem>>) target_semaphore(%11 : memref<!tpu.dma_semaphore, #tpu.memory_space<semaphore_mem>>)
    %c1_i32_18 = arith.constant 1 : i32
    %c0_i32_19 = arith.constant 0 : i32
    %c1_i32_20 = arith.constant 1 : i32
    %c0_i32_21 = arith.constant 0 : i32
    %c1_i32_22 = arith.constant 1 : i32
    %c0_i32_23 = arith.constant 0 : i32
    %c0_i32_24 = arith.constant 0 : i32
    %c0_i32_25 = arith.constant 0 : i32
    %12 = tpu.memref_slice %arg0[%c1_i32_18, %c0_i32_19, %c0_i32_24, %c0_i32_25] : memref<2x2x2x256xf32, #tpu.memory_space<any>> -> memref<1x1x2x256xf32, #tpu.memory_space<any>>
    %13 = tpu.memref_squeeze %12 : memref<1x1x2x256xf32, #tpu.memory_space<any>> -> memref<2x256xf32, #tpu.memory_space<any>>
    %c0_i32_26 = arith.constant 0 : i32
    %c0_i32_27 = arith.constant 0 : i32
    %14 = tpu.memref_slice %arg2[%c1_i32_20, %c0_i32_26, %c0_i32_21, %c0_i32_27] : memref<2x2x2x256xf32, #tpu.memory_space<vmem>> -> memref<1x2x1x256xf32, #tpu.memory_space<vmem>>
    %15 = tpu.memref_squeeze %14 : memref<1x2x1x256xf32, #tpu.memory_space<vmem>> -> memref<2x256xf32, #tpu.memory_space<vmem>>
    %16 = tpu.memref_slice %arg3[%c1_i32_22, %c0_i32_23] : memref<2x2x!tpu.dma_semaphore, #tpu.memory_space<semaphore_mem>> -> memref<1x1x!tpu.dma_semaphore, #tpu.memory_space<semaphore_mem>>
    %17 = tpu.memref_squeeze %16 : memref<1x1x!tpu.dma_semaphore, #tpu.memory_space<semaphore_mem>> -> memref<!tpu.dma_semaphore, #tpu.memory_space<semaphore_mem>>
    tpu.enqueue_dma source(%13 : memref<2x256xf32, #tpu.memory_space<any>>) target(%15 : memref<2x256xf32, #tpu.memory_space<vmem>>) target_semaphore(%17 : memref<!tpu.dma_semaphore, #tpu.memory_space<semaphore_mem>>)
    %c1_i32_28 = arith.constant 1 : i32
    %c1_i32_29 = arith.constant 1 : i32
    %c1_i32_30 = arith.constant 1 : i32
    %c1_i32_31 = arith.constant 1 : i32
    %c1_i32_32 = arith.constant 1 : i32
    %c1_i32_33 = arith.constant 1 : i32
    %c0_i32_34 = arith.constant 0 : i32
    %c0_i32_35 = arith.constant 0 : i32
    %18 = tpu.memref_slice %arg0[%c1_i32_28, %c1_i32_29, %c0_i32_34, %c0_i32_35] : memref<2x2x2x256xf32, #tpu.memory_space<any>> -> memref<1x1x2x256xf32, #tpu.memory_space<any>>
    %19 = tpu.memref_squeeze %18 : memref<1x1x2x256xf32, #tpu.memory_space<any>> -> memref<2x256xf32, #tpu.memory_space<any>>
    %c0_i32_36 = arith.constant 0 : i32
    %c0_i32_37 = arith.constant 0 : i32
    %20 = tpu.memref_slice %arg2[%c1_i32_30, %c0_i32_36, %c1_i32_31, %c0_i32_37] : memref<2x2x2x256xf32, #tpu.memory_space<vmem>> -> memref<1x2x1x256xf32, #tpu.memory_space<vmem>>
    %21 = tpu.memref_squeeze %20 : memref<1x2x1x256xf32, #tpu.memory_space<vmem>> -> memref<2x256xf32, #tpu.memory_space<vmem>>
    %22 = tpu.memref_slice %arg3[%c1_i32_32, %c1_i32_33] : memref<2x2x!tpu.dma_semaphore, #tpu.memory_space<semaphore_mem>> -> memref<1x1x!tpu.dma_semaphore, #tpu.memory_space<semaphore_mem>>
    %23 = tpu.memref_squeeze %22 : memref<1x1x!tpu.dma_semaphore, #tpu.memory_space<semaphore_mem>> -> memref<!tpu.dma_semaphore, #tpu.memory_space<semaphore_mem>>
    tpu.enqueue_dma source(%19 : memref<2x256xf32, #tpu.memory_space<any>>) target(%21 : memref<2x256xf32, #tpu.memory_space<vmem>>) target_semaphore(%23 : memref<!tpu.dma_semaphore, #tpu.memory_space<semaphore_mem>>)
    %c0_i32_38 = arith.constant 0 : i32
    %c0_i32_39 = arith.constant 0 : i32
    %c0_i32_40 = arith.constant 0 : i32
    %c0_i32_41 = arith.constant 0 : i32
    %c0_i32_42 = arith.constant 0 : i32
    %c0_i32_43 = arith.constant 0 : i32
    %c0_i32_44 = arith.constant 0 : i32
    %c0_i32_45 = arith.constant 0 : i32
    %24 = tpu.memref_slice %arg0[%c0_i32_38, %c0_i32_39, %c0_i32_44, %c0_i32_45] : memref<2x2x2x256xf32, #tpu.memory_space<any>> -> memref<1x1x2x256xf32, #tpu.memory_space<any>>
    %25 = tpu.memref_squeeze %24 : memref<1x1x2x256xf32, #tpu.memory_space<any>> -> memref<2x256xf32, #tpu.memory_space<any>>
    %c0_i32_46 = arith.constant 0 : i32
    %c0_i32_47 = arith.constant 0 : i32
    %26 = tpu.memref_slice %arg2[%c0_i32_40, %c0_i32_46, %c0_i32_41, %c0_i32_47] : memref<2x2x2x256xf32, #tpu.memory_space<vmem>> -> memref<1x2x1x256xf32, #tpu.memory_space<vmem>>
    %27 = tpu.memref_squeeze %26 : memref<1x2x1x256xf32, #tpu.memory_space<vmem>> -> memref<2x256xf32, #tpu.memory_space<vmem>>
    %28 = tpu.memref_slice %arg3[%c0_i32_42, %c0_i32_43] : memref<2x2x!tpu.dma_semaphore, #tpu.memory_space<semaphore_mem>> -> memref<1x1x!tpu.dma_semaphore, #tpu.memory_space<semaphore_mem>>
    %29 = tpu.memref_squeeze %28 : memref<1x1x!tpu.dma_semaphore, #tpu.memory_space<semaphore_mem>> -> memref<!tpu.dma_semaphore, #tpu.memory_space<semaphore_mem>>
    tpu.wait_dma2 semaphore(%29 : memref<!tpu.dma_semaphore, #tpu.memory_space<semaphore_mem>>) src(%25 : memref<2x256xf32, #tpu.memory_space<any>>) dst(%27 : memref<2x256xf32, #tpu.memory_space<vmem>>)
    %c0_i32_48 = arith.constant 0 : i32
    %c1_i32_49 = arith.constant 1 : i32
    %c0_i32_50 = arith.constant 0 : i32
    %c1_i32_51 = arith.constant 1 : i32
    %c0_i32_52 = arith.constant 0 : i32
    %c1_i32_53 = arith.constant 1 : i32
    %c0_i32_54 = arith.constant 0 : i32
    %c0_i32_55 = arith.constant 0 : i32
    %30 = tpu.memref_slice %arg0[%c0_i32_48, %c1_i32_49, %c0_i32_54, %c0_i32_55] : memref<2x2x2x256xf32, #tpu.memory_space<any>> -> memref<1x1x2x256xf32, #tpu.memory_space<any>>
    %31 = tpu.memref_squeeze %30 : memref<1x1x2x256xf32, #tpu.memory_space<any>> -> memref<2x256xf32, #tpu.memory_space<any>>
    %c0_i32_56 = arith.constant 0 : i32
    %c0_i32_57 = arith.constant 0 : i32
    %32 = tpu.memref_slice %arg2[%c0_i32_50, %c0_i32_56, %c1_i32_51, %c0_i32_57] : memref<2x2x2x256xf32, #tpu.memory_space<vmem>> -> memref<1x2x1x256xf32, #tpu.memory_space<vmem>>
    %33 = tpu.memref_squeeze %32 : memref<1x2x1x256xf32, #tpu.memory_space<vmem>> -> memref<2x256xf32, #tpu.memory_space<vmem>>
    %34 = tpu.memref_slice %arg3[%c0_i32_52, %c1_i32_53] : memref<2x2x!tpu.dma_semaphore, #tpu.memory_space<semaphore_mem>> -> memref<1x1x!tpu.dma_semaphore, #tpu.memory_space<semaphore_mem>>
    %35 = tpu.memref_squeeze %34 : memref<1x1x!tpu.dma_semaphore, #tpu.memory_space<semaphore_mem>> -> memref<!tpu.dma_semaphore, #tpu.memory_space<semaphore_mem>>
    tpu.wait_dma2 semaphore(%35 : memref<!tpu.dma_semaphore, #tpu.memory_space<semaphore_mem>>) src(%31 : memref<2x256xf32, #tpu.memory_space<any>>) dst(%33 : memref<2x256xf32, #tpu.memory_space<vmem>>)
    %c0_i32_58 = arith.constant 0 : i32
    %c0_i32_59 = arith.constant 0 : i32
    %c0_i32_60 = arith.constant 0 : i32
    %c0_i32_61 = arith.constant 0 : i32
    %c0_i32_62 = arith.constant 0 : i32
    %c0_i32_63 = arith.constant 0 : i32
    %36 = tpu.memref_slice %arg2[%c0_i32_58, %c0_i32_61, %c0_i32_62, %c0_i32_63] : memref<2x2x2x256xf32, #tpu.memory_space<vmem>> -> memref<1x2x2x256xf32, #tpu.memory_space<vmem>>
    %37 = tpu.memref_squeeze %36 : memref<1x2x2x256xf32, #tpu.memory_space<vmem>> -> memref<2x2x256xf32, #tpu.memory_space<vmem>>
    %c0_i32_64 = arith.constant 0 : i32
    %c0_i32_65 = arith.constant 0 : i32
    %c0_i32_66 = arith.constant 0 : i32
    %38 = tpu.memref_slice %arg1[%c0_i32_59, %c0_i32_64, %c0_i32_65, %c0_i32_66] : memref<2x2x2x256xf32, #tpu.memory_space<any>> -> memref<1x2x2x256xf32, #tpu.memory_space<any>>
    %39 = tpu.memref_squeeze %38 : memref<1x2x2x256xf32, #tpu.memory_space<any>> -> memref<2x2x256xf32, #tpu.memory_space<any>>
    %40 = tpu.memref_slice %arg4[%c0_i32_60] : memref<2x!tpu.dma_semaphore, #tpu.memory_space<semaphore_mem>> -> memref<1x!tpu.dma_semaphore, #tpu.memory_space<semaphore_mem>>
    %41 = tpu.memref_squeeze %40 : memref<1x!tpu.dma_semaphore, #tpu.memory_space<semaphore_mem>> -> memref<!tpu.dma_semaphore, #tpu.memory_space<semaphore_mem>>
    tpu.enqueue_dma source(%37 : memref<2x2x256xf32, #tpu.memory_space<vmem>>) target(%39 : memref<2x2x256xf32, #tpu.memory_space<any>>) target_semaphore(%41 : memref<!tpu.dma_semaphore, #tpu.memory_space<semaphore_mem>>)
    %c1_i32_67 = arith.constant 1 : i32
    %c0_i32_68 = arith.constant 0 : i32
    %c1_i32_69 = arith.constant 1 : i32
    %c0_i32_70 = arith.constant 0 : i32
    %c1_i32_71 = arith.constant 1 : i32
    %c0_i32_72 = arith.constant 0 : i32
    %c0_i32_73 = arith.constant 0 : i32
    %c0_i32_74 = arith.constant 0 : i32
    %42 = tpu.memref_slice %arg0[%c1_i32_67, %c0_i32_68, %c0_i32_73, %c0_i32_74] : memref<2x2x2x256xf32, #tpu.memory_space<any>> -> memref<1x1x2x256xf32, #tpu.memory_space<any>>
    %43 = tpu.memref_squeeze %42 : memref<1x1x2x256xf32, #tpu.memory_space<any>> -> memref<2x256xf32, #tpu.memory_space<any>>
    %c0_i32_75 = arith.constant 0 : i32
    %c0_i32_76 = arith.constant 0 : i32
    %44 = tpu.memref_slice %arg2[%c1_i32_69, %c0_i32_75, %c0_i32_70, %c0_i32_76] : memref<2x2x2x256xf32, #tpu.memory_space<vmem>> -> memref<1x2x1x256xf32, #tpu.memory_space<vmem>>
    %45 = tpu.memref_squeeze %44 : memref<1x2x1x256xf32, #tpu.memory_space<vmem>> -> memref<2x256xf32, #tpu.memory_space<vmem>>
    %46 = tpu.memref_slice %arg3[%c1_i32_71, %c0_i32_72] : memref<2x2x!tpu.dma_semaphore, #tpu.memory_space<semaphore_mem>> -> memref<1x1x!tpu.dma_semaphore, #tpu.memory_space<semaphore_mem>>
    %47 = tpu.memref_squeeze %46 : memref<1x1x!tpu.dma_semaphore, #tpu.memory_space<semaphore_mem>> -> memref<!tpu.dma_semaphore, #tpu.memory_space<semaphore_mem>>
    tpu.wait_dma2 semaphore(%47 : memref<!tpu.dma_semaphore, #tpu.memory_space<semaphore_mem>>) src(%43 : memref<2x256xf32, #tpu.memory_space<any>>) dst(%45 : memref<2x256xf32, #tpu.memory_space<vmem>>)
    %c1_i32_77 = arith.constant 1 : i32
    %c1_i32_78 = arith.constant 1 : i32
    %c1_i32_79 = arith.constant 1 : i32
    %c1_i32_80 = arith.constant 1 : i32
    %c1_i32_81 = arith.constant 1 : i32
    %c1_i32_82 = arith.constant 1 : i32
    %c0_i32_83 = arith.constant 0 : i32
    %c0_i32_84 = arith.constant 0 : i32
    %48 = tpu.memref_slice %arg0[%c1_i32_77, %c1_i32_78, %c0_i32_83, %c0_i32_84] : memref<2x2x2x256xf32, #tpu.memory_space<any>> -> memref<1x1x2x256xf32, #tpu.memory_space<any>>
    %49 = tpu.memref_squeeze %48 : memref<1x1x2x256xf32, #tpu.memory_space<any>> -> memref<2x256xf32, #tpu.memory_space<any>>
    %c0_i32_85 = arith.constant 0 : i32
    %c0_i32_86 = arith.constant 0 : i32
    %50 = tpu.memref_slice %arg2[%c1_i32_79, %c0_i32_85, %c1_i32_80, %c0_i32_86] : memref<2x2x2x256xf32, #tpu.memory_space<vmem>> -> memref<1x2x1x256xf32, #tpu.memory_space<vmem>>
    %51 = tpu.memref_squeeze %50 : memref<1x2x1x256xf32, #tpu.memory_space<vmem>> -> memref<2x256xf32, #tpu.memory_space<vmem>>
    %52 = tpu.memref_slice %arg3[%c1_i32_81, %c1_i32_82] : memref<2x2x!tpu.dma_semaphore, #tpu.memory_space<semaphore_mem>> -> memref<1x1x!tpu.dma_semaphore, #tpu.memory_space<semaphore_mem>>
    %53 = tpu.memref_squeeze %52 : memref<1x1x!tpu.dma_semaphore, #tpu.memory_space<semaphore_mem>> -> memref<!tpu.dma_semaphore, #tpu.memory_space<semaphore_mem>>
    tpu.wait_dma2 semaphore(%53 : memref<!tpu.dma_semaphore, #tpu.memory_space<semaphore_mem>>) src(%49 : memref<2x256xf32, #tpu.memory_space<any>>) dst(%51 : memref<2x256xf32, #tpu.memory_space<vmem>>)
    %c1_i32_87 = arith.constant 1 : i32
    %c1_i32_88 = arith.constant 1 : i32
    %c1_i32_89 = arith.constant 1 : i32
    %c0_i32_90 = arith.constant 0 : i32
    %c0_i32_91 = arith.constant 0 : i32
    %c0_i32_92 = arith.constant 0 : i32
    %54 = tpu.memref_slice %arg2[%c1_i32_87, %c0_i32_90, %c0_i32_91, %c0_i32_92] : memref<2x2x2x256xf32, #tpu.memory_space<vmem>> -> memref<1x2x2x256xf32, #tpu.memory_space<vmem>>
    %55 = tpu.memref_squeeze %54 : memref<1x2x2x256xf32, #tpu.memory_space<vmem>> -> memref<2x2x256xf32, #tpu.memory_space<vmem>>
    %c0_i32_93 = arith.constant 0 : i32
    %c0_i32_94 = arith.constant 0 : i32
    %c0_i32_95 = arith.constant 0 : i32
    %56 = tpu.memref_slice %arg1[%c1_i32_88, %c0_i32_93, %c0_i32_94, %c0_i32_95] : memref<2x2x2x256xf32, #tpu.memory_space<any>> -> memref<1x2x2x256xf32, #tpu.memory_space<any>>
    %57 = tpu.memref_squeeze %56 : memref<1x2x2x256xf32, #tpu.memory_space<any>> -> memref<2x2x256xf32, #tpu.memory_space<any>>
    %58 = tpu.memref_slice %arg4[%c1_i32_89] : memref<2x!tpu.dma_semaphore, #tpu.memory_space<semaphore_mem>> -> memref<1x!tpu.dma_semaphore, #tpu.memory_space<semaphore_mem>>
    %59 = tpu.memref_squeeze %58 : memref<1x!tpu.dma_semaphore, #tpu.memory_space<semaphore_mem>> -> memref<!tpu.dma_semaphore, #tpu.memory_space<semaphore_mem>>
    tpu.enqueue_dma source(%55 : memref<2x2x256xf32, #tpu.memory_space<vmem>>) target(%57 : memref<2x2x256xf32, #tpu.memory_space<any>>) target_semaphore(%59 : memref<!tpu.dma_semaphore, #tpu.memory_space<semaphore_mem>>)
    %c0_i32_96 = arith.constant 0 : i32
    %c0_i32_97 = arith.constant 0 : i32
    %c0_i32_98 = arith.constant 0 : i32
    %c0_i32_99 = arith.constant 0 : i32
    %c0_i32_100 = arith.constant 0 : i32
    %c0_i32_101 = arith.constant 0 : i32
    %60 = tpu.memref_slice %arg2[%c0_i32_96, %c0_i32_99, %c0_i32_100, %c0_i32_101] : memref<2x2x2x256xf32, #tpu.memory_space<vmem>> -> memref<1x2x2x256xf32, #tpu.memory_space<vmem>>
    %61 = tpu.memref_squeeze %60 : memref<1x2x2x256xf32, #tpu.memory_space<vmem>> -> memref<2x2x256xf32, #tpu.memory_space<vmem>>
    %c0_i32_102 = arith.constant 0 : i32
    %c0_i32_103 = arith.constant 0 : i32
    %c0_i32_104 = arith.constant 0 : i32
    %62 = tpu.memref_slice %arg1[%c0_i32_97, %c0_i32_102, %c0_i32_103, %c0_i32_104] : memref<2x2x2x256xf32, #tpu.memory_space<any>> -> memref<1x2x2x256xf32, #tpu.memory_space<any>>
    %63 = tpu.memref_squeeze %62 : memref<1x2x2x256xf32, #tpu.memory_space<any>> -> memref<2x2x256xf32, #tpu.memory_space<any>>
    %64 = tpu.memref_slice %arg4[%c0_i32_98] : memref<2x!tpu.dma_semaphore, #tpu.memory_space<semaphore_mem>> -> memref<1x!tpu.dma_semaphore, #tpu.memory_space<semaphore_mem>>
    %65 = tpu.memref_squeeze %64 : memref<1x!tpu.dma_semaphore, #tpu.memory_space<semaphore_mem>> -> memref<!tpu.dma_semaphore, #tpu.memory_space<semaphore_mem>>
    tpu.wait_dma2 semaphore(%65 : memref<!tpu.dma_semaphore, #tpu.memory_space<semaphore_mem>>) src(%61 : memref<2x2x256xf32, #tpu.memory_space<vmem>>) dst(%63 : memref<2x2x256xf32, #tpu.memory_space<any>>)
    %c1_i32_105 = arith.constant 1 : i32
    %c1_i32_106 = arith.constant 1 : i32
    %c1_i32_107 = arith.constant 1 : i32
    %c0_i32_108 = arith.constant 0 : i32
    %c0_i32_109 = arith.constant 0 : i32
    %c0_i32_110 = arith.constant 0 : i32
    %66 = tpu.memref_slice %arg2[%c1_i32_105, %c0_i32_108, %c0_i32_109, %c0_i32_110] : memref<2x2x2x256xf32, #tpu.memory_space<vmem>> -> memref<1x2x2x256xf32, #tpu.memory_space<vmem>>
    %67 = tpu.memref_squeeze %66 : memref<1x2x2x256xf32, #tpu.memory_space<vmem>> -> memref<2x2x256xf32, #tpu.memory_space<vmem>>
    %c0_i32_111 = arith.constant 0 : i32
    %c0_i32_112 = arith.constant 0 : i32
    %c0_i32_113 = arith.constant 0 : i32
    %68 = tpu.memref_slice %arg1[%c1_i32_106, %c0_i32_111, %c0_i32_112, %c0_i32_113] : memref<2x2x2x256xf32, #tpu.memory_space<any>> -> memref<1x2x2x256xf32, #tpu.memory_space<any>>
    %69 = tpu.memref_squeeze %68 : memref<1x2x2x256xf32, #tpu.memory_space<any>> -> memref<2x2x256xf32, #tpu.memory_space<any>>
    %70 = tpu.memref_slice %arg4[%c1_i32_107] : memref<2x!tpu.dma_semaphore, #tpu.memory_space<semaphore_mem>> -> memref<1x!tpu.dma_semaphore, #tpu.memory_space<semaphore_mem>>
    %71 = tpu.memref_squeeze %70 : memref<1x!tpu.dma_semaphore, #tpu.memory_space<semaphore_mem>> -> memref<!tpu.dma_semaphore, #tpu.memory_space<semaphore_mem>>
    tpu.wait_dma2 semaphore(%71 : memref<!tpu.dma_semaphore, #tpu.memory_space<semaphore_mem>>) src(%67 : memref<2x2x256xf32, #tpu.memory_space<vmem>>) dst(%69 : memref<2x2x256xf32, #tpu.memory_space<any>>)
    return
  }
}

</mosaic_0001>

<llo_original>
// kernel: channel_shuffle.1
$region0: #{channel_shuffle.1}
  #allocation0 [shape = 'u32[]', space=smem, size = 0x4, offset = 0x4, fixed_abs, tag = 'smem constant byte address 0x4 - core index']
  #allocation1 [shape = 'u32[144,128]{1,0:T(1,128)}', space=vmem, size = 0x12000, scoped, tag = 'internal scratch']
  #allocation2 [shape = 'f32[2,2,2,256]{3,2,1,0:T(2,128)}', space=vmem, size = 0x2000, scoped, tag = 'scratch operand']
  #allocation3 [shape = 's32[4]{0}', space=sflag, size = 0x10, scoped, tag = 'scratch operand']
  #allocation4 [shape = 's32[2]{0}', space=sflag, size = 0x8, scoped, tag = 'scratch operand']
  #allocation5 [shape = 's32[]', space=sflag, size = 0x4, offset = 0, fixed_abs, tag = 'sflag constant byte address 0x0 - dummy sync flag']
  #allocation6 [shape = 's32[]', space=sflag, size = 0x4, offset = 0, fixed_abs, tag = 'sflag constant byte address 0x0 - dummy sync flag']
  #allocation7 [shape = 's32[]', space=sflag, size = 0x4, offset = 0, fixed_abs, tag = 'sflag constant byte address 0x0 - dummy sync flag']
  #allocation8 [shape = 's32[]', space=sflag, size = 0x4, offset = 0, fixed_abs, tag = 'sflag constant byte address 0x0 - dummy sync flag']
  #allocation9 [shape = 's32[]', space=sflag, size = 0x4, offset = 0, fixed_abs, tag = 'sflag constant byte address 0x0 - dummy sync flag']
  #allocation10 [shape = 's32[]', space=sflag, size = 0x4, offset = 0, fixed_abs, tag = 'sflag constant byte address 0x0 - dummy sync flag']
  %s0 = inlined_call_operand.vmem [shape: f32[2,2,2,256], index: 0, kind: input, shape index: {}]
  %s1 = inlined_call_operand.vmem [shape: f32[2,2,2,256], index: 1, kind: output, shape index: {}]
  %s2 = sld [smem:[#allocation0]]
  $region190: #{channel_shuffle.1} parent=0
    _
  %s4 = ssub.s32 1, %s2
  %s5 = scalar_select 0, %s4, %s2
  %p7 = scmp.lt.u32.totalorder 1, 8
  %p8 = pneg %p7
  // Predicated region
  $region2: #{channel_shuffle.1} parent=0 // pred_check
    _
  $region3: #{channel_shuffle.1} parent=0 // pred_check_branch
    %10 = sbr.rel (%p7) target = $region5
  $region4: #{channel_shuffle.1} parent=0 // pred_region
    %s32 = sand.u32 1, 7
    %p33 = scmp.eq.s32.totalorder %s32, 0
    %p34 = pneg %p33
    // Predicated region
    $region17: #{channel_shuffle.1} parent=4 // pred_check
      _
    $region18: #{channel_shuffle.1} parent=4 // pred_check_branch
      %36 = sbr.rel (%p33) target = $region20
    $region19: #{channel_shuffle.1} parent=4 // pred_region
      %s37 = sand.u32 1, 7
      %s38 = ssub.s32 1, %s37
      %s39 = scalar_lea.vmem %s0, %s38
      %s40 = ssub.s32 1, %s37
      %s41 = scalar_lea.vmem [#allocation2], %s40
      %s42 = sshll.u32 1, %s37
      %s43 = ssub.s32 %s42, 1
      loop: start=0, step=1, limit=1
      $region21: #{channel_shuffle.1} parent=19 // loop_pre_header
        _
      $region22: #{channel_shuffle.1} parent=19 // loop_header
        %s45 = sphi 0, %s49
        %p46 = scmp.ge.s32.totalorder %s45, 1
        %s50 = sphi %s39, %s39
        %s51 = sphi %s41, %s41
      $region23: #{channel_shuffle.1} parent=19 // loop_header_branch
        %48 = sbr.rel (%p46) target = $region27
      $region24: #{channel_shuffle.1} parent=19 // loop_body
        %v52 = vld [vmem:[%s50] sm:%s43]
        %53 = vst [vmem:[%s51] sm:%s43] %v52
        %v54 = vld [vmem:[%s50 + $0x1] sm:%s43]
        %55 = vst [vmem:[%s51 + $0x4] sm:%s43] %v54
        %v56 = vld [vmem:[%s50 + $0x2] sm:%s43]
        %57 = vst [vmem:[%s51 + $0x2] sm:%s43] %v56
        %v58 = vld [vmem:[%s50 + $0x3] sm:%s43]
        %59 = vst [vmem:[%s51 + $0x6] sm:%s43] %v58
      $region25: #{channel_shuffle.1} parent=19 // loop_footer
        %s49 = sadd.s32 1, %s45
      $region26: #{channel_shuffle.1} parent=19 // loop_footer_branch
        %44 = sbr.rel target = $region22
      $region27: #{channel_shuffle.1} parent=19 // loop_exit
        _
    $region20: #{channel_shuffle.1} parent=4 // pred_fallthru
      _
  $region5: #{channel_shuffle.1} parent=0 // pred_fallthru
    _
  // Predicated region
  $region6: #{channel_shuffle.1} parent=0 // pred_check
    %p11 = pneg %p7
  $region7: #{channel_shuffle.1} parent=0 // pred_check_branch
    %13 = sbr.rel (%p11) target = $region9
  $region8: #{channel_shuffle.1} parent=0 // pred_region
    %s14 = sshll.u32 1, 1
    %s15 = ssub.s32 %s14, 1
    loop: start=0, step=1, limit=1
    $region10: #{channel_shuffle.1} parent=8 // loop_pre_header
      _
    $region11: #{channel_shuffle.1} parent=8 // loop_header
      %s17 = sphi 0, %s21
      %p18 = scmp.ge.s32.totalorder %s17, 1
      %s22 = sphi %s0, %s0
      %s23 = sphi [#allocation2], [#allocation2]
    $region12: #{channel_shuffle.1} parent=8 // loop_header_branch
      %20 = sbr.rel (%p18) target = $region16
    $region13: #{channel_shuffle.1} parent=8 // loop_body
      %v24 = vld [vmem:[%s22] sm:%s15]
      %25 = vst [vmem:[%s23] sm:%s15] %v24
      %v26 = vld [vmem:[%s22 + $0x1] sm:%s15]
      %27 = vst [vmem:[%s23 + $0x4] sm:%s15] %v26
      %v28 = vld [vmem:[%s22 + $0x2] sm:%s15]
      %29 = vst [vmem:[%s23 + $0x2] sm:%s15] %v28
      %v30 = vld [vmem:[%s22 + $0x3] sm:%s15]
      %31 = vst [vmem:[%s23 + $0x6] sm:%s15] %v30
    $region14: #{channel_shuffle.1} parent=8 // loop_footer
      %s21 = sadd.s32 1, %s17
    $region15: #{channel_shuffle.1} parent=8 // loop_footer_branch
      %16 = sbr.rel target = $region11
    $region16: #{channel_shuffle.1} parent=8 // loop_exit
      _
  $region9: #{channel_shuffle.1} parent=0 // pred_fallthru
    _
  // Predicated region
  $region28: #{channel_shuffle.1} parent=0 // pred_check
    _
  $region29: #{channel_shuffle.1} parent=0 // pred_check_branch
    %62 = sbr.rel (0) target = $region31
  $region30: #{channel_shuffle.1} parent=0 // pred_region
    %63 = vsyncadd [#allocation3], 64
  $region31: #{channel_shuffle.1} parent=0 // pred_fallthru
    _
  %s64 = scalar_lea.vmem %s0, 4
  %s65 = scalar_lea.vmem [#allocation2], 1
  %s66 = scalar_lea.sflag [#allocation3], 1
  %p68 = scmp.lt.u32.totalorder 1, 8
  %p69 = pneg %p68
  // Predicated region
  $region32: #{channel_shuffle.1} parent=0 // pred_check
    _
  $region33: #{channel_shuffle.1} parent=0 // pred_check_branch
    %71 = sbr.rel (%p68) target = $region35
  $region34: #{channel_shuffle.1} parent=0 // pred_region
    %s93 = sand.u32 1, 7
    %p94 = scmp.eq.s32.totalorder %s93, 0
    %p95 = pneg %p94
    // Predicated region
    $region47: #{channel_shuffle.1} parent=34 // pred_check
      _
    $region48: #{channel_shuffle.1} parent=34 // pred_check_branch
      %97 = sbr.rel (%p94) target = $region50
    $region49: #{channel_shuffle.1} parent=34 // pred_region
      %s98 = sand.u32 1, 7
      %s99 = ssub.s32 1, %s98
      %s100 = scalar_lea.vmem %s64, %s99
      %s101 = ssub.s32 1, %s98
      %s102 = scalar_lea.vmem %s65, %s101 [#allocation2]
      %s103 = sshll.u32 1, %s98
      %s104 = ssub.s32 %s103, 1
      loop: start=0, step=1, limit=1
      $region51: #{channel_shuffle.1} parent=49 // loop_pre_header
        _
      $region52: #{channel_shuffle.1} parent=49 // loop_header
        %s106 = sphi 0, %s110
        %p107 = scmp.ge.s32.totalorder %s106, 1
        %s111 = sphi %s100, %s100
        %s112 = sphi %s102, %s102
      $region53: #{channel_shuffle.1} parent=49 // loop_header_branch
        %109 = sbr.rel (%p107) target = $region57
      $region54: #{channel_shuffle.1} parent=49 // loop_body
        %v113 = vld [vmem:[%s111] sm:%s104]
        %114 = vst [vmem:[%s112] sm:%s104] %v113
        %v115 = vld [vmem:[%s111 + $0x1] sm:%s104]
        %116 = vst [vmem:[%s112 + $0x4] sm:%s104] %v115
        %v117 = vld [vmem:[%s111 + $0x2] sm:%s104]
        %118 = vst [vmem:[%s112 + $0x2] sm:%s104] %v117
        %v119 = vld [vmem:[%s111 + $0x3] sm:%s104]
        %120 = vst [vmem:[%s112 + $0x6] sm:%s104] %v119
      $region55: #{channel_shuffle.1} parent=49 // loop_footer
        %s110 = sadd.s32 1, %s106
      $region56: #{channel_shuffle.1} parent=49 // loop_footer_branch
        %105 = sbr.rel target = $region52
      $region57: #{channel_shuffle.1} parent=49 // loop_exit
        _
    $region50: #{channel_shuffle.1} parent=34 // pred_fallthru
      _
  $region35: #{channel_shuffle.1} parent=0 // pred_fallthru
    _
  // Predicated region
  $region36: #{channel_shuffle.1} parent=0 // pred_check
    %p72 = pneg %p68
  $region37: #{channel_shuffle.1} parent=0 // pred_check_branch
    %74 = sbr.rel (%p72) target = $region39
  $region38: #{channel_shuffle.1} parent=0 // pred_region
    %s75 = sshll.u32 1, 1
    %s76 = ssub.s32 %s75, 1
    loop: start=0, step=1, limit=1
    $region40: #{channel_shuffle.1} parent=38 // loop_pre_header
      _
    $region41: #{channel_shuffle.1} parent=38 // loop_header
      %s78 = sphi 0, %s82
      %p79 = scmp.ge.s32.totalorder %s78, 1
      %s83 = sphi %s64, %s64
      %s84 = sphi %s65, %s65
    $region42: #{channel_shuffle.1} parent=38 // loop_header_branch
      %81 = sbr.rel (%p79) target = $region46
    $region43: #{channel_shuffle.1} parent=38 // loop_body
      %v85 = vld [vmem:[%s83] sm:%s76]
      %86 = vst [vmem:[%s84] sm:%s76] %v85
      %v87 = vld [vmem:[%s83 + $0x1] sm:%s76]
      %88 = vst [vmem:[%s84 + $0x4] sm:%s76] %v87
      %v89 = vld [vmem:[%s83 + $0x2] sm:%s76]
      %90 = vst [vmem:[%s84 + $0x2] sm:%s76] %v89
      %v91 = vld [vmem:[%s83 + $0x3] sm:%s76]
      %92 = vst [vmem:[%s84 + $0x6] sm:%s76] %v91
    $region44: #{channel_shuffle.1} parent=38 // loop_footer
      %s82 = sadd.s32 1, %s78
    $region45: #{channel_shuffle.1} parent=38 // loop_footer_branch
      %77 = sbr.rel target = $region41
    $region46: #{channel_shuffle.1} parent=38 // loop_exit
      _
  $region39: #{channel_shuffle.1} parent=0 // pred_fallthru
    _
  // Predicated region
  $region58: #{channel_shuffle.1} parent=0 // pred_check
    _
  $region59: #{channel_shuffle.1} parent=0 // pred_check_branch
    %123 = sbr.rel (0) target = $region61
  $region60: #{channel_shuffle.1} parent=0 // pred_region
    %124 = vsyncadd %s66, 64
  $region61: #{channel_shuffle.1} parent=0 // pred_fallthru
    _
  %s125 = scalar_lea.vmem %s0, 8
  %s126 = scalar_lea.vmem [#allocation2], 8
  %s127 = scalar_lea.sflag [#allocation3], 2
  %p129 = scmp.lt.u32.totalorder 1, 8
  %p130 = pneg %p129
  // Predicated region
  $region62: #{channel_shuffle.1} parent=0 // pred_check
    _
  $region63: #{channel_shuffle.1} parent=0 // pred_check_branch
    %132 = sbr.rel (%p129) target = $region65
  $region64: #{channel_shuffle.1} parent=0 // pred_region
    %s154 = sand.u32 1, 7
    %p155 = scmp.eq.s32.totalorder %s154, 0
    %p156 = pneg %p155
    // Predicated region
    $region77: #{channel_shuffle.1} parent=64 // pred_check
      _
    $region78: #{channel_shuffle.1} parent=64 // pred_check_branch
      %158 = sbr.rel (%p155) target = $region80
    $region79: #{channel_shuffle.1} parent=64 // pred_region
      %s159 = sand.u32 1, 7
      %s160 = ssub.s32 1, %s159
      %s161 = scalar_lea.vmem %s125, %s160
      %s162 = ssub.s32 1, %s159
      %s163 = scalar_lea.vmem %s126, %s162 [#allocation2]
      %s164 = sshll.u32 1, %s159
      %s165 = ssub.s32 %s164, 1
      loop: start=0, step=1, limit=1
      $region81: #{channel_shuffle.1} parent=79 // loop_pre_header
        _
      $region82: #{channel_shuffle.1} parent=79 // loop_header
        %s167 = sphi 0, %s171
        %p168 = scmp.ge.s32.totalorder %s167, 1
        %s172 = sphi %s161, %s161
        %s173 = sphi %s163, %s163
      $region83: #{channel_shuffle.1} parent=79 // loop_header_branch
        %170 = sbr.rel (%p168) target = $region87
      $region84: #{channel_shuffle.1} parent=79 // loop_body
        %v174 = vld [vmem:[%s172] sm:%s165]
        %175 = vst [vmem:[%s173] sm:%s165] %v174
        %v176 = vld [vmem:[%s172 + $0x1] sm:%s165]
        %177 = vst [vmem:[%s173 + $0x4] sm:%s165] %v176
        %v178 = vld [vmem:[%s172 + $0x2] sm:%s165]
        %179 = vst [vmem:[%s173 + $0x2] sm:%s165] %v178
        %v180 = vld [vmem:[%s172 + $0x3] sm:%s165]
        %181 = vst [vmem:[%s173 + $0x6] sm:%s165] %v180
      $region85: #{channel_shuffle.1} parent=79 // loop_footer
        %s171 = sadd.s32 1, %s167
      $region86: #{channel_shuffle.1} parent=79 // loop_footer_branch
        %166 = sbr.rel target = $region82
      $region87: #{channel_shuffle.1} parent=79 // loop_exit
        _
    $region80: #{channel_shuffle.1} parent=64 // pred_fallthru
      _
  $region65: #{channel_shuffle.1} parent=0 // pred_fallthru
    _
  // Predicated region
  $region66: #{channel_shuffle.1} parent=0 // pred_check
    %p133 = pneg %p129
  $region67: #{channel_shuffle.1} parent=0 // pred_check_branch
    %135 = sbr.rel (%p133) target = $region69
  $region68: #{channel_shuffle.1} parent=0 // pred_region
    %s136 = sshll.u32 1, 1
    %s137 = ssub.s32 %s136, 1
    loop: start=0, step=1, limit=1
    $region70: #{channel_shuffle.1} parent=68 // loop_pre_header
      _
    $region71: #{channel_shuffle.1} parent=68 // loop_header
      %s139 = sphi 0, %s143
      %p140 = scmp.ge.s32.totalorder %s139, 1
      %s144 = sphi %s125, %s125
      %s145 = sphi %s126, %s126
    $region72: #{channel_shuffle.1} parent=68 // loop_header_branch
      %142 = sbr.rel (%p140) target = $region76
    $region73: #{channel_shuffle.1} parent=68 // loop_body
      %v146 = vld [vmem:[%s144] sm:%s137]
      %147 = vst [vmem:[%s145] sm:%s137] %v146
      %v148 = vld [vmem:[%s144 + $0x1] sm:%s137]
      %149 = vst [vmem:[%s145 + $0x4] sm:%s137] %v148
      %v150 = vld [vmem:[%s144 + $0x2] sm:%s137]
      %151 = vst [vmem:[%s145 + $0x2] sm:%s137] %v150
      %v152 = vld [vmem:[%s144 + $0x3] sm:%s137]
      %153 = vst [vmem:[%s145 + $0x6] sm:%s137] %v152
    $region74: #{channel_shuffle.1} parent=68 // loop_footer
      %s143 = sadd.s32 1, %s139
    $region75: #{channel_shuffle.1} parent=68 // loop_footer_branch
      %138 = sbr.rel target = $region71
    $region76: #{channel_shuffle.1} parent=68 // loop_exit
      _
  $region69: #{channel_shuffle.1} parent=0 // pred_fallthru
    _
  // Predicated region
  $region88: #{channel_shuffle.1} parent=0 // pred_check
    _
  $region89: #{channel_shuffle.1} parent=0 // pred_check_branch
    %184 = sbr.rel (0) target = $region91
  $region90: #{channel_shuffle.1} parent=0 // pred_region
    %185 = vsyncadd %s127, 64
  $region91: #{channel_shuffle.1} parent=0 // pred_fallthru
    _
  %s186 = scalar_lea.vmem %s0, 12
  %s187 = scalar_lea.vmem [#allocation2], 9
  %s188 = scalar_lea.sflag [#allocation3], 3
  %p190 = scmp.lt.u32.totalorder 1, 8
  %p191 = pneg %p190
  // Predicated region
  $region92: #{channel_shuffle.1} parent=0 // pred_check
    _
  $region93: #{channel_shuffle.1} parent=0 // pred_check_branch
    %193 = sbr.rel (%p190) target = $region95
  $region94: #{channel_shuffle.1} parent=0 // pred_region
    %s215 = sand.u32 1, 7
    %p216 = scmp.eq.s32.totalorder %s215, 0
    %p217 = pneg %p216
    // Predicated region
    $region107: #{channel_shuffle.1} parent=94 // pred_check
      _
    $region108: #{channel_shuffle.1} parent=94 // pred_check_branch
      %219 = sbr.rel (%p216) target = $region110
    $region109: #{channel_shuffle.1} parent=94 // pred_region
      %s220 = sand.u32 1, 7
      %s221 = ssub.s32 1, %s220
      %s222 = scalar_lea.vmem %s186, %s221
      %s223 = ssub.s32 1, %s220
      %s224 = scalar_lea.vmem %s187, %s223 [#allocation2]
      %s225 = sshll.u32 1, %s220
      %s226 = ssub.s32 %s225, 1
      loop: start=0, step=1, limit=1
      $region111: #{channel_shuffle.1} parent=109 // loop_pre_header
        _
      $region112: #{channel_shuffle.1} parent=109 // loop_header
        %s228 = sphi 0, %s232
        %p229 = scmp.ge.s32.totalorder %s228, 1
        %s233 = sphi %s222, %s222
        %s234 = sphi %s224, %s224
      $region113: #{channel_shuffle.1} parent=109 // loop_header_branch
        %231 = sbr.rel (%p229) target = $region117
      $region114: #{channel_shuffle.1} parent=109 // loop_body
        %v235 = vld [vmem:[%s233] sm:%s226]
        %236 = vst [vmem:[%s234] sm:%s226] %v235
        %v237 = vld [vmem:[%s233 + $0x1] sm:%s226]
        %238 = vst [vmem:[%s234 + $0x4] sm:%s226] %v237
        %v239 = vld [vmem:[%s233 + $0x2] sm:%s226]
        %240 = vst [vmem:[%s234 + $0x2] sm:%s226] %v239
        %v241 = vld [vmem:[%s233 + $0x3] sm:%s226]
        %242 = vst [vmem:[%s234 + $0x6] sm:%s226] %v241
      $region115: #{channel_shuffle.1} parent=109 // loop_footer
        %s232 = sadd.s32 1, %s228
      $region116: #{channel_shuffle.1} parent=109 // loop_footer_branch
        %227 = sbr.rel target = $region112
      $region117: #{channel_shuffle.1} parent=109 // loop_exit
        _
    $region110: #{channel_shuffle.1} parent=94 // pred_fallthru
      _
  $region95: #{channel_shuffle.1} parent=0 // pred_fallthru
    _
  // Predicated region
  $region96: #{channel_shuffle.1} parent=0 // pred_check
    %p194 = pneg %p190
  $region97: #{channel_shuffle.1} parent=0 // pred_check_branch
    %196 = sbr.rel (%p194) target = $region99
  $region98: #{channel_shuffle.1} parent=0 // pred_region
    %s197 = sshll.u32 1, 1
    %s198 = ssub.s32 %s197, 1
    loop: start=0, step=1, limit=1
    $region100: #{channel_shuffle.1} parent=98 // loop_pre_header
      _
    $region101: #{channel_shuffle.1} parent=98 // loop_header
      %s200 = sphi 0, %s204
      %p201 = scmp.ge.s32.totalorder %s200, 1
      %s205 = sphi %s186, %s186
      %s206 = sphi %s187, %s187
    $region102: #{channel_shuffle.1} parent=98 // loop_header_branch
      %203 = sbr.rel (%p201) target = $region106
    $region103: #{channel_shuffle.1} parent=98 // loop_body
      %v207 = vld [vmem:[%s205] sm:%s198]
      %208 = vst [vmem:[%s206] sm:%s198] %v207
      %v209 = vld [vmem:[%s205 + $0x1] sm:%s198]
      %210 = vst [vmem:[%s206 + $0x4] sm:%s198] %v209
      %v211 = vld [vmem:[%s205 + $0x2] sm:%s198]
      %212 = vst [vmem:[%s206 + $0x2] sm:%s198] %v211
      %v213 = vld [vmem:[%s205 + $0x3] sm:%s198]
      %214 = vst [vmem:[%s206 + $0x6] sm:%s198] %v213
    $region104: #{channel_shuffle.1} parent=98 // loop_footer
      %s204 = sadd.s32 1, %s200
    $region105: #{channel_shuffle.1} parent=98 // loop_footer_branch
      %199 = sbr.rel target = $region101
    $region106: #{channel_shuffle.1} parent=98 // loop_exit
      _
  $region99: #{channel_shuffle.1} parent=0 // pred_fallthru
    _
  // Predicated region
  $region118: #{channel_shuffle.1} parent=0 // pred_check
    _
  $region119: #{channel_shuffle.1} parent=0 // pred_check_branch
    %245 = sbr.rel (0) target = $region121
  $region120: #{channel_shuffle.1} parent=0 // pred_region
    %246 = vsyncadd %s188, 64
  $region121: #{channel_shuffle.1} parent=0 // pred_fallthru
    _
  %s247 = smul.u32 2, 2
  %s248 = sshll.u32 %s247, 4
  %249 = dma.done [#allocation3], %s248
  %s250 = sshll.u32 %s247, 4
  %251 = dma.done %s66, %s250
  %p253 = scmp.lt.u32.totalorder 8, 8
  %p254 = pneg %p253
  // Predicated region
  $region122: #{channel_shuffle.1} parent=0 // pred_check
    _
  $region123: #{channel_shuffle.1} parent=0 // pred_check_branch
    %256 = sbr.rel (%p253) target = $region125
  $region124: #{channel_shuffle.1} parent=0 // pred_region
    %s272 = sand.u32 8, 7
    %p273 = scmp.eq.s32.totalorder %s272, 0
    // Predicated region
    $region137: #{channel_shuffle.1} parent=124 // pred_check
      %p274 = pneg %p273
    $region138: #{channel_shuffle.1} parent=124 // pred_check_branch
      %276 = sbr.rel (%p274) target = $region140
    $region139: #{channel_shuffle.1} parent=124 // pred_region
      loop: start=0, step=1, limit=1
      $region141: #{channel_shuffle.1} parent=139 // loop_pre_header
        _
      $region142: #{channel_shuffle.1} parent=139 // loop_header
        %s278 = sphi 0, %s282
        %p279 = scmp.ge.s32.totalorder %s278, 1
        %s283 = sphi [#allocation2], [#allocation2]
        %s284 = sphi %s1, %s1
      $region143: #{channel_shuffle.1} parent=139 // loop_header_branch
        %281 = sbr.rel (%p279) target = $region147
      $region144: #{channel_shuffle.1} parent=139 // loop_body
        %v285 = vld [vmem:[%s283] sm:$0xff]
        %286 = vst [vmem:[%s284] sm:$0xff] %v285
      $region145: #{channel_shuffle.1} parent=139 // loop_footer
        %s282 = sadd.s32 1, %s278
      $region146: #{channel_shuffle.1} parent=139 // loop_footer_branch
        %277 = sbr.rel target = $region142
      $region147: #{channel_shuffle.1} parent=139 // loop_exit
        _
    $region140: #{channel_shuffle.1} parent=124 // pred_fallthru
      _
    %p287 = pneg %p273
    // Predicated region
    $region148: #{channel_shuffle.1} parent=124 // pred_check
      _
    $region149: #{channel_shuffle.1} parent=124 // pred_check_branch
      %289 = sbr.rel (%p273) target = $region151
    $region150: #{channel_shuffle.1} parent=124 // pred_region
      %s290 = sand.u32 8, 7
    $region151: #{channel_shuffle.1} parent=124 // pred_fallthru
      _
  $region125: #{channel_shuffle.1} parent=0 // pred_fallthru
    _
  // Predicated region
  $region126: #{channel_shuffle.1} parent=0 // pred_check
    %p257 = pneg %p253
  $region127: #{channel_shuffle.1} parent=0 // pred_check_branch
    %259 = sbr.rel (%p257) target = $region129
  $region128: #{channel_shuffle.1} parent=0 // pred_region
    %s260 = sshll.u32 1, 8
    %s261 = ssub.s32 %s260, 1
    loop: start=0, step=1, limit=1
    $region130: #{channel_shuffle.1} parent=128 // loop_pre_header
      _
    $region131: #{channel_shuffle.1} parent=128 // loop_header
      %s263 = sphi 0, %s267
      %p264 = scmp.ge.s32.totalorder %s263, 1
      %s268 = sphi [#allocation2], [#allocation2]
      %s269 = sphi %s1, %s1
    $region132: #{channel_shuffle.1} parent=128 // loop_header_branch
      %266 = sbr.rel (%p264) target = $region136
    $region133: #{channel_shuffle.1} parent=128 // loop_body
      %v270 = vld [vmem:[%s268] sm:%s261]
      %271 = vst [vmem:[%s269] sm:%s261] %v270
    $region134: #{channel_shuffle.1} parent=128 // loop_footer
      %s267 = sadd.s32 1, %s263
    $region135: #{channel_shuffle.1} parent=128 // loop_footer_branch
      %262 = sbr.rel target = $region131
    $region136: #{channel_shuffle.1} parent=128 // loop_exit
      _
  $region129: #{channel_shuffle.1} parent=0 // pred_fallthru
    _
  // Predicated region
  $region152: #{channel_shuffle.1} parent=0 // pred_check
    _
  $region153: #{channel_shuffle.1} parent=0 // pred_check_branch
    %293 = sbr.rel (0) target = $region155
  $region154: #{channel_shuffle.1} parent=0 // pred_region
    %294 = vsyncadd [#allocation4], 128
  $region155: #{channel_shuffle.1} parent=0 // pred_fallthru
    _
  %s295 = sshll.u32 %s247, 4
  %296 = dma.done %s127, %s295
  %s297 = sshll.u32 %s247, 4
  %298 = dma.done %s188, %s297
  %s299 = scalar_lea.vmem [#allocation2], 8
  %s300 = scalar_lea.vmem %s1, 8
  %s301 = scalar_lea.sflag [#allocation4], 1
  %p303 = scmp.lt.u32.totalorder 8, 8
  %p304 = pneg %p303
  // Predicated region
  $region156: #{channel_shuffle.1} parent=0 // pred_check
    _
  $region157: #{channel_shuffle.1} parent=0 // pred_check_branch
    %306 = sbr.rel (%p303) target = $region159
  $region158: #{channel_shuffle.1} parent=0 // pred_region
    %s322 = sand.u32 8, 7
    %p323 = scmp.eq.s32.totalorder %s322, 0
    // Predicated region
    $region171: #{channel_shuffle.1} parent=158 // pred_check
      %p324 = pneg %p323
    $region172: #{channel_shuffle.1} parent=158 // pred_check_branch
      %326 = sbr.rel (%p324) target = $region174
    $region173: #{channel_shuffle.1} parent=158 // pred_region
      loop: start=0, step=1, limit=1
      $region175: #{channel_shuffle.1} parent=173 // loop_pre_header
        _
      $region176: #{channel_shuffle.1} parent=173 // loop_header
        %s328 = sphi 0, %s332
        %p329 = scmp.ge.s32.totalorder %s328, 1
        %s333 = sphi %s299, %s299
        %s334 = sphi %s300, %s300
      $region177: #{channel_shuffle.1} parent=173 // loop_header_branch
        %331 = sbr.rel (%p329) target = $region181
      $region178: #{channel_shuffle.1} parent=173 // loop_body
        %v335 = vld [vmem:[%s333] sm:$0xff]
        %336 = vst [vmem:[%s334] sm:$0xff] %v335
      $region179: #{channel_shuffle.1} parent=173 // loop_footer
        %s332 = sadd.s32 1, %s328
      $region180: #{channel_shuffle.1} parent=173 // loop_footer_branch
        %327 = sbr.rel target = $region176
      $region181: #{channel_shuffle.1} parent=173 // loop_exit
        _
    $region174: #{channel_shuffle.1} parent=158 // pred_fallthru
      _
    %p337 = pneg %p323
    // Predicated region
    $region182: #{channel_shuffle.1} parent=158 // pred_check
      _
    $region183: #{channel_shuffle.1} parent=158 // pred_check_branch
      %339 = sbr.rel (%p323) target = $region185
    $region184: #{channel_shuffle.1} parent=158 // pred_region
      %s340 = sand.u32 8, 7
    $region185: #{channel_shuffle.1} parent=158 // pred_fallthru
      _
  $region159: #{channel_shuffle.1} parent=0 // pred_fallthru
    _
  // Predicated region
  $region160: #{channel_shuffle.1} parent=0 // pred_check
    %p307 = pneg %p303
  $region161: #{channel_shuffle.1} parent=0 // pred_check_branch
    %309 = sbr.rel (%p307) target = $region163
  $region162: #{channel_shuffle.1} parent=0 // pred_region
    %s310 = sshll.u32 1, 8
    %s311 = ssub.s32 %s310, 1
    loop: start=0, step=1, limit=1
    $region164: #{channel_shuffle.1} parent=162 // loop_pre_header
      _
    $region165: #{channel_shuffle.1} parent=162 // loop_header
      %s313 = sphi 0, %s317
      %p314 = scmp.ge.s32.totalorder %s313, 1
      %s318 = sphi %s299, %s299
      %s319 = sphi %s300, %s300
    $region166: #{channel_shuffle.1} parent=162 // loop_header_branch
      %316 = sbr.rel (%p314) target = $region170
    $region167: #{channel_shuffle.1} parent=162 // loop_body
      %v320 = vld [vmem:[%s318] sm:%s311]
      %321 = vst [vmem:[%s319] sm:%s311] %v320
    $region168: #{channel_shuffle.1} parent=162 // loop_footer
      %s317 = sadd.s32 1, %s313
    $region169: #{channel_shuffle.1} parent=162 // loop_footer_branch
      %312 = sbr.rel target = $region165
    $region170: #{channel_shuffle.1} parent=162 // loop_exit
      _
  $region163: #{channel_shuffle.1} parent=0 // pred_fallthru
    _
  // Predicated region
  $region186: #{channel_shuffle.1} parent=0 // pred_check
    _
  $region187: #{channel_shuffle.1} parent=0 // pred_check_branch
    %343 = sbr.rel (0) target = $region189
  $region188: #{channel_shuffle.1} parent=0 // pred_region
    %344 = vsyncadd %s301, 128
  $region189: #{channel_shuffle.1} parent=0 // pred_fallthru
    _
  %s345 = smul.u32 %s247, 1
  %s346 = smul.u32 %s345, 2
  %s347 = sshll.u32 %s346, 4
  %348 = dma.done [#allocation4], %s347
  %s349 = sshll.u32 %s346, 4
  %350 = dma.done %s301, %s349
  %351 = vsyncmov [#allocation3]
  %s352 = vpop.sfrf %351
  %p353 = scmp.eq.s32.totalorder %s352, 0
  %p354 = pneg %p353
  %356 = shalt.err (%p354)
  %s357 = scalar_lea.sflag [#allocation3], 1
  %358 = vsyncmov %s357
  %s359 = vpop.sfrf %358
  %p360 = scmp.eq.s32.totalorder %s359, 0
  %p361 = pneg %p360
  %363 = shalt.err (%p361)
  %s364 = scalar_lea.sflag [#allocation3], 2
  %365 = vsyncmov %s364
  %s366 = vpop.sfrf %365
  %p367 = scmp.eq.s32.totalorder %s366, 0
  %p368 = pneg %p367
  %370 = shalt.err (%p368)
  %s371 = scalar_lea.sflag [#allocation3], 3
  %372 = vsyncmov %s371
  %s373 = vpop.sfrf %372
  %p374 = scmp.eq.s32.totalorder %s373, 0
  %p375 = pneg %p374
  %377 = shalt.err (%p375)
  %378 = vsyncmov [#allocation4]
  %s379 = vpop.sfrf %378
  %p380 = scmp.eq.s32.totalorder %s379, 0
  %p381 = pneg %p380
  %383 = shalt.err (%p381)
  %s384 = scalar_lea.sflag [#allocation4], 1
  %385 = vsyncmov %s384
  %s386 = vpop.sfrf %385
  %p387 = scmp.eq.s32.totalorder %s386, 0
  %p388 = pneg %p387
  %390 = shalt.err (%p388)

</llo_original>
